<compile_context>
chip_gen: v7x
topology: tpu7x:2x2x1
jax: 0.10.0
libtpu: 0.0.40
codegen_flags: <defaults>
</compile_context>

<pallas_src>
import math

import jax
import jax.numpy as jnp
from jax.experimental import pallas as pl
from jax.experimental.pallas import tpu as pltpu


# --------------------------------------------------------------------------
# Kernels
# --------------------------------------------------------------------------
def _abs_matmul_single_kernel(x_ref, o_ref):
    """One-shot |x| @ |x| for matrices that fit in VMEM."""
    a = jnp.abs(x_ref[...])
    o_ref[...] = jnp.dot(a, a, preferred_element_type=jnp.float32).astype(o_ref.dtype)


def _abs_matmul_kernel_f32(a_ref, b_ref, o_ref):
    """Tiled |x| @ |x|, accumulating directly into the resident f32 output tile."""
    k = pl.program_id(2)

    @pl.when(k == 0)
    def _():
        o_ref[...] = jnp.zeros_like(o_ref)

    o_ref[...] += jnp.dot(
        jnp.abs(a_ref[...]), jnp.abs(b_ref[...]),
        preferred_element_type=jnp.float32,
    )


def _abs_matmul_kernel_scratch(a_ref, b_ref, o_ref, acc_ref):
    """Tiled |x| @ |x| with an f32 scratch accumulator (narrow output dtypes)."""
    k = pl.program_id(2)

    @pl.when(k == 0)
    def _():
        acc_ref[...] = jnp.zeros_like(acc_ref)

    acc_ref[...] += jnp.dot(
        jnp.abs(a_ref[...]), jnp.abs(b_ref[...]),
        preferred_element_type=jnp.float32,
    )

    @pl.when(k == pl.num_programs(2) - 1)
    def _():
        o_ref[...] = acc_ref[...].astype(o_ref.dtype)


# --------------------------------------------------------------------------
# Wrappers
# --------------------------------------------------------------------------
def _round_up(n, m):
    return ((n + m - 1) // m) * m


def _single_block_call(x):
    N = x.shape[0]
    return pl.pallas_call(
        _abs_matmul_single_kernel,
        out_shape=jax.ShapeDtypeStruct((N, N), x.dtype),
    )(x)


def _tiled_call(x, tm, tn, tk):
    Np = x.shape[0]
    grid = (Np // tm, Np // tn, Np // tk)

    if x.dtype == jnp.float32:
        # Output tile is f32 and resident across k: accumulate in place.
        kernel = _abs_matmul_kernel_f32
        scratch_shapes = []
    else:
        kernel = _abs_matmul_kernel_scratch
        scratch_shapes = [pltpu.VMEM((tm, tn), jnp.float32)]

    return pl.pallas_call(
        kernel,
        out_shape=jax.ShapeDtypeStruct((Np, Np), x.dtype),
        grid_spec=pltpu.PrefetchScalarGridSpec(
            num_scalar_prefetch=0,
            grid=grid,
            in_specs=[
                # LHS tile of x: rows follow i, cols follow k.
                pl.BlockSpec((tm, tk), lambda i, j, k: (i, k)),
                # RHS tile of the SAME x: rows follow k, cols follow j.
                pl.BlockSpec((tk, tn), lambda i, j, k: (k, j)),
            ],
            out_specs=pl.BlockSpec((tm, tn), lambda i, j, k: (i, j)),
            scratch_shapes=scratch_shapes,
        ),
        compiler_params=pltpu.CompilerParams(
            dimension_semantics=("parallel", "parallel", "arbitrary"),
            vmem_limit_bytes=48 * 1024 * 1024,
        ),
    )(x, x)


def my_r2loss(x, *, tm=None, tn=None, tk=None, fast_path_bytes=2 << 20):
    """Computes |x| @ |x| for a square matrix x via Pallas TPU kernels."""
    N, K = x.shape
    assert N == K, "torch.mm(x, x) requires a square matrix"

    # ---- small-N fast path: one grid step, whole matrix in VMEM -------------
    if tm is None and tn is None and tk is None and N * N * x.dtype.itemsize <= fast_path_bytes:
        return _single_block_call(x)

    # ---- tiled path: pick 512-class (256-multiple) tiles from N -------------
    if tm is None or tn is None or tk is None:
        Np_probe = _round_up(N, 256)
        b = 512 if Np_probe % 512 == 0 else 256
        tm = tm if tm is not None else b
        tn = tn if tn is not None else b
        tk = tk if tk is not None else b

    # Pad to a common multiple of the tile sizes; zeros are inert under abs+matmul.
    Np = _round_up(N, math.lcm(tm, tn, tk))
    xp = x if Np == N else jnp.pad(x, ((0, Np - N), (0, Np - N)))

    out = _tiled_call(xp, tm, tn, tk)
    return out if Np == N else out[:N, :N]


# --------------------------------------------------------------------------
# Demo / correctness check
# --------------------------------------------------------------------------
if __name__ == "__main__":
    key = jax.random.PRNGKey(0)
    k1, k2 = jax.random.split(key)

    # 1) Small matrix -> single-block fast path.
    N1 = 256
    x1 = jax.random.normal(k1, (N1, N1), dtype=jnp.float32)
    out1 = jax.block_until_ready(my_r2loss(x1))
    ref1 = jnp.abs(x1) @ jnp.abs(x1)
    assert out1.shape == (N1, N1)
    assert jnp.allclose(out1, ref1, atol=1e-2, rtol=1e-3)

    # 2) Larger (non-512-multiple) matrix -> tiled path with 256 tiles.
    N2 = 768
    x2 = jax.random.normal(k2, (N2, N2), dtype=jnp.float32)
    out2 = jax.block_until_ready(my_r2loss(x2))
    ref2 = jnp.abs(x2) @ jnp.abs(x2)
    assert out2.shape == (N2, N2)
    assert jnp.allclose(out2, ref2, atol=1e-2, rtol=1e-3)

    print("KERNEL_OK")
</pallas_src>

<mosaic_0001>
module attributes {stable_mosaic.version = 11 : i64} {
  func.func @_abs_matmul_single_kernel(%arg0: memref<256x256xf32, #tpu.memory_space<vmem>>, %arg1: memref<256x256xf32, #tpu.memory_space<vmem>>) attributes {dimension_semantics = [], scalar_prefetch = 0 : i64, scratch_operands = 0 : i64, tpu.core_type = #tpu.core_type<tc>} {
    %c0 = arith.constant 0 : index
    %c0_0 = arith.constant 0 : index
    %0 = vector.load %arg0[%c0, %c0_0] : memref<256x256xf32, #tpu.memory_space<vmem>>, vector<256x256xf32>
    %1 = math.absf %0 : vector<256x256xf32>
    %cst = arith.constant dense<0.000000e+00> : vector<256x256xf32>
    %2 = tpu.matmul %1, %1, %cst {dimension_numbers = #tpu.dot_dimension_numbers<[1], [0], [0], [1], [0, 0, 1, 1], [], []>} : vector<256x256xf32>, vector<256x256xf32>, vector<256x256xf32> -> vector<256x256xf32>
    %c0_1 = arith.constant 0 : index
    %c0_2 = arith.constant 0 : index
    %3 = vector.load %arg1[%c0_1, %c0_2] : memref<256x256xf32, #tpu.memory_space<vmem>>, vector<256x256xf32>
    tpu.vector_store %arg1[%c0_1, %c0_2], %2 {strides = array<i32>} : memref<256x256xf32, #tpu.memory_space<vmem>>, vector<256x256xf32>,
    return
  }
}

</mosaic_0001>

<llo_original>
// kernel: tpu_custom_call.1
$region0: #{tpu_custom_call.1}
  #allocation0 [shape = 'u32[]', space=smem, size = 0x4, offset = 0x4, fixed_abs, tag = 'smem constant byte address 0x4 - core index']
  #allocation1 [shape = 'u32[144,128]{1,0:T(1,128)}', space=vmem, size = 0x12000, scoped, tag = 'internal scratch']
  %s0 = inlined_call_operand.hbm [shape: f32[256,256], index: 0, kind: input, shape index: {}]
  %s1 = inlined_call_operand.hbm [shape: f32[256,256], index: 1, kind: output, shape index: {}]
  %s2 = sld [smem:[#allocation0]]
  $region18: #{tpu_custom_call.1} parent=0
    _
  %s4 = ssub.s32 1, %s2
  %s5 = scalar_select 0, %s4, %s2
  $region1: #{tpu_custom_call.1} parent=0
    #allocation2 [shape = 'u8[262144]{0}', space=vmem, size = 0x40000, scoped, tag = 'input window, operand 0, single buffered']
    #allocation3 [shape = 's32[1]{0}', space=sflag, size = 0x4, scoped, tag = 'scoped memory for tpu_custom_call.1']
    #allocation4 [shape = 's32[1]{0}', space=sflag, size = 0x4, scoped, tag = 'scoped memory for tpu_custom_call.1']
    #allocation5 [shape = 'u8[262144]{0}', space=vmem, size = 0x40000, scoped, tag = 'output window, operand 0, single buffered']
    %6 = vsyncpa [#allocation3], 0
    %7 = vsyncpa [#allocation4], 0
    // Predicated region
    $region2: #{tpu_custom_call.1} parent=1 // pred_check
      _
    $region3: #{tpu_custom_call.1} parent=1 // pred_check_branch
      %9 = sbr.rel (0) target = $region5
    $region4: #{tpu_custom_call.1} parent=1 // pred_region
      %s11 = ssub.s32 8192, 8192
      %12 = vsyncadd [#allocation3], %s11
      %s13 = sshll.u32 [#allocation2], 4
      %s14 = int_to_ptr.vmem [resolvable:$true] %s13
      %19 = dma.hbm_to_vmem [thread:$0]  %s0, 8192, %s14, [#allocation3], 256, 256, 16
    $region5: #{tpu_custom_call.1} parent=1 // pred_fallthru
      _
    // Predicated region
    $region6: #{tpu_custom_call.1} parent=1 // pred_check
      _
    $region7: #{tpu_custom_call.1} parent=1 // pred_check_branch
      %21 = sbr.rel (0) target = $region9
    $region8: #{tpu_custom_call.1} parent=1 // pred_region
      %22 = dma.done [#allocation3], 8192
    $region9: #{tpu_custom_call.1} parent=1 // pred_fallthru
      _
    %v23 = vld [vmem:[#allocation2] sm:$0xff]
    %v24 = vld [vmem:[#allocation2 + $0x8] sm:$0xff]
    %v25 = vld [vmem:[#allocation2 + $0x10] sm:$0xff]
    %v26 = vld [vmem:[#allocation2 + $0x18] sm:$0xff]
    %v27 = vld [vmem:[#allocation2 + $0x20] sm:$0xff]
    %v28 = vld [vmem:[#allocation2 + $0x28] sm:$0xff]
    %v29 = vld [vmem:[#allocation2 + $0x30] sm:$0xff]
    %v30 = vld [vmem:[#allocation2 + $0x38] sm:$0xff]
    %v31 = vld [vmem:[#allocation2 + $0x40] sm:$0xff]
    %v32 = vld [vmem:[#allocation2 + $0x48] sm:$0xff]
    %v33 = vld [vmem:[#allocation2 + $0x50] sm:$0xff]
    %v34 = vld [vmem:[#allocation2 + $0x58] sm:$0xff]
    %v35 = vld [vmem:[#allocation2 + $0x60] sm:$0xff]
    %v36 = vld [vmem:[#allocation2 + $0x68] sm:$0xff]
    %v37 = vld [vmem:[#allocation2 + $0x70] sm:$0xff]
    %v38 = vld [vmem:[#allocation2 + $0x78] sm:$0xff]
    %v39 = vld [vmem:[#allocation2 + $0x80] sm:$0xff]
    %v40 = vld [vmem:[#allocation2 + $0x88] sm:$0xff]
    %v41 = vld [vmem:[#allocation2 + $0x90] sm:$0xff]
    %v42 = vld [vmem:[#allocation2 + $0x98] sm:$0xff]
    %v43 = vld [vmem:[#allocation2 + $0xa0] sm:$0xff]
    %v44 = vld [vmem:[#allocation2 + $0xa8] sm:$0xff]
    %v45 = vld [vmem:[#allocation2 + $0xb0] sm:$0xff]
    %v46 = vld [vmem:[#allocation2 + $0xb8] sm:$0xff]
    %v47 = vld [vmem:[#allocation2 + $0xc0] sm:$0xff]
    %v48 = vld [vmem:[#allocation2 + $0xc8] sm:$0xff]
    %v49 = vld [vmem:[#allocation2 + $0xd0] sm:$0xff]
    %v50 = vld [vmem:[#allocation2 + $0xd8] sm:$0xff]
    %v51 = vld [vmem:[#allocation2 + $0xe0] sm:$0xff]
    %v52 = vld [vmem:[#allocation2 + $0xe8] sm:$0xff]
    %v53 = vld [vmem:[#allocation2 + $0xf0] sm:$0xff]
    %v54 = vld [vmem:[#allocation2 + $0xf8] sm:$0xff]
    %v55 = vld [vmem:[#allocation2 + $0x100] sm:$0xff]
    %v56 = vld [vmem:[#allocation2 + $0x108] sm:$0xff]
    %v57 = vld [vmem:[#allocation2 + $0x110] sm:$0xff]
    %v58 = vld [vmem:[#allocation2 + $0x118] sm:$0xff]
    %v59 = vld [vmem:[#allocation2 + $0x120] sm:$0xff]
    %v60 = vld [vmem:[#allocation2 + $0x128] sm:$0xff]
    %v61 = vld [vmem:[#allocation2 + $0x130] sm:$0xff]
    %v62 = vld [vmem:[#allocation2 + $0x138] sm:$0xff]
    %v63 = vld [vmem:[#allocation2 + $0x140] sm:$0xff]
    %v64 = vld [vmem:[#allocation2 + $0x148] sm:$0xff]
    %v65 = vld [vmem:[#allocation2 + $0x150] sm:$0xff]
    %v66 = vld [vmem:[#allocation2 + $0x158] sm:$0xff]
    %v67 = vld [vmem:[#allocation2 + $0x160] sm:$0xff]
    %v68 = vld [vmem:[#allocation2 + $0x168] sm:$0xff]
    %v69 = vld [vmem:[#allocation2 + $0x170] sm:$0xff]
    %v70 = vld [vmem:[#allocation2 + $0x178] sm:$0xff]
    %v71 = vld [vmem:[#allocation2 + $0x180] sm:$0xff]
    %v72 = vld [vmem:[#allocation2 + $0x188] sm:$0xff]
    %v73 = vld [vmem:[#allocation2 + $0x190] sm:$0xff]
    %v74 = vld [vmem:[#allocation2 + $0x198] sm:$0xff]
    %v75 = vld [vmem:[#allocation2 + $0x1a0] sm:$0xff]
    %v76 = vld [vmem:[#allocation2 + $0x1a8] sm:$0xff]
    %v77 = vld [vmem:[#allocation2 + $0x1b0] sm:$0xff]
    %v78 = vld [vmem:[#allocation2 + $0x1b8] sm:$0xff]
    %v79 = vld [vmem:[#allocation2 + $0x1c0] sm:$0xff]
    %v80 = vld [vmem:[#allocation2 + $0x1c8] sm:$0xff]
    %v81 = vld [vmem:[#allocation2 + $0x1d0] sm:$0xff]
    %v82 = vld [vmem:[#allocation2 + $0x1d8] sm:$0xff]
    %v83 = vld [vmem:[#allocation2 + $0x1e0] sm:$0xff]
    %v84 = vld [vmem:[#allocation2 + $0x1e8] sm:$0xff]
    %v85 = vld [vmem:[#allocation2 + $0x1f0] sm:$0xff]
    %v86 = vld [vmem:[#allocation2 + $0x1f8] sm:$0xff]
    %v87 = vand.u32 2147483647, %v23
    %v88 = vand.u32 2147483647, %v24
    %v89 = vand.u32 2147483647, %v25
    %v90 = vand.u32 2147483647, %v26
    %v91 = vand.u32 2147483647, %v27
    %v92 = vand.u32 2147483647, %v28
    %v93 = vand.u32 2147483647, %v29
    %v94 = vand.u32 2147483647, %v30
    %v95 = vand.u32 2147483647, %v31
    %v96 = vand.u32 2147483647, %v32
    %v97 = vand.u32 2147483647, %v33
    %v98 = vand.u32 2147483647, %v34
    %v99 = vand.u32 2147483647, %v35
    %v100 = vand.u32 2147483647, %v36
    %v101 = vand.u32 2147483647, %v37
    %v102 = vand.u32 2147483647, %v38
    %v103 = vand.u32 2147483647, %v39
    %v104 = vand.u32 2147483647, %v40
    %v105 = vand.u32 2147483647, %v41
    %v106 = vand.u32 2147483647, %v42
    %v107 = vand.u32 2147483647, %v43
    %v108 = vand.u32 2147483647, %v44
    %v109 = vand.u32 2147483647, %v45
    %v110 = vand.u32 2147483647, %v46
    %v111 = vand.u32 2147483647, %v47
    %v112 = vand.u32 2147483647, %v48
    %v113 = vand.u32 2147483647, %v49
    %v114 = vand.u32 2147483647, %v50
    %v115 = vand.u32 2147483647, %v51
    %v116 = vand.u32 2147483647, %v52
    %v117 = vand.u32 2147483647, %v53
    %v118 = vand.u32 2147483647, %v54
    %v119 = vand.u32 2147483647, %v55
    %v120 = vand.u32 2147483647, %v56
    %v121 = vand.u32 2147483647, %v57
    %v122 = vand.u32 2147483647, %v58
    %v123 = vand.u32 2147483647, %v59
    %v124 = vand.u32 2147483647, %v60
    %v125 = vand.u32 2147483647, %v61
    %v126 = vand.u32 2147483647, %v62
    %v127 = vand.u32 2147483647, %v63
    %v128 = vand.u32 2147483647, %v64
    %v129 = vand.u32 2147483647, %v65
    %v130 = vand.u32 2147483647, %v66
    %v131 = vand.u32 2147483647, %v67
    %v132 = vand.u32 2147483647, %v68
    %v133 = vand.u32 2147483647, %v69
    %v134 = vand.u32 2147483647, %v70
    %v135 = vand.u32 2147483647, %v71
    %v136 = vand.u32 2147483647, %v72
    %v137 = vand.u32 2147483647, %v73
    %v138 = vand.u32 2147483647, %v74
    %v139 = vand.u32 2147483647, %v75
    %v140 = vand.u32 2147483647, %v76
    %v141 = vand.u32 2147483647, %v77
    %v142 = vand.u32 2147483647, %v78
    %v143 = vand.u32 2147483647, %v79
    %v144 = vand.u32 2147483647, %v80
    %v145 = vand.u32 2147483647, %v81
    %v146 = vand.u32 2147483647, %v82
    %v147 = vand.u32 2147483647, %v83
    %v148 = vand.u32 2147483647, %v84
    %v149 = vand.u32 2147483647, %v85
    %v150 = vand.u32 2147483647, %v86
    %151 = vmatprep.subr.mxu0 %v88
    %152 = vmatpush1.msra.mxu0 %v87
    %153 = vmatprep.subr.mxu0 %v90
    %154 = vmatpush1.msra.mxu0 %v89
    %155 = vmatprep.subr.mxu0 %v92
    %156 = vmatpush1.msra.mxu0 %v91
    %157 = vmatprep.subr.mxu0 %v94
    %158 = vmatpush1.msra.mxu0 %v93
    %159 = vmatprep.subr.mxu0 %v96
    %160 = vmatpush1.msra.mxu0 %v95
    %161 = vmatprep.subr.mxu0 %v98
    %162 = vmatpush1.msra.mxu0 %v97
    %163 = vmatprep.subr.mxu0 %v100
    %164 = vmatpush1.msra.mxu0 %v99
    %165 = vmatprep.subr.mxu0 %v102
    %166 = vmatpush1.msra.mxu0 %v101
    %167 = vmatprep.subr.mxu0 %v104
    %168 = vmatpush1.msra.mxu0 %v103
    %169 = vmatprep.subr.mxu0 %v106
    %170 = vmatpush1.msra.mxu0 %v105
    %171 = vmatprep.subr.mxu0 %v108
    %172 = vmatpush1.msra.mxu0 %v107
    %173 = vmatprep.subr.mxu0 %v110
    %174 = vmatpush1.msra.mxu0 %v109
    %175 = vmatprep.subr.mxu0 %v112
    %176 = vmatpush1.msra.mxu0 %v111
    %177 = vmatprep.subr.mxu0 %v114
    %178 = vmatpush1.msra.mxu0 %v113
    %179 = vmatprep.subr.mxu0 %v116
    %180 = vmatpush1.msra.mxu0 %v115
    %181 = vmatprep.subr.mxu0 %v118
    %182 = vmatpush1.msra.mxu0 %v117
    %183 = vmatprep.subr.mxu0 %v120
    %184 = vmatpush1.msra.mxu0 %v119
    %185 = vmatprep.subr.mxu0 %v122
    %186 = vmatpush1.msra.mxu0 %v121
    %187 = vmatprep.subr.mxu0 %v124
    %188 = vmatpush1.msra.mxu0 %v123
    %189 = vmatprep.subr.mxu0 %v126
    %190 = vmatpush1.msra.mxu0 %v125
    %191 = vmatprep.subr.mxu0 %v128
    %192 = vmatpush1.msra.mxu0 %v127
    %193 = vmatprep.subr.mxu0 %v130
    %194 = vmatpush1.msra.mxu0 %v129
    %195 = vmatprep.subr.mxu0 %v132
    %196 = vmatpush1.msra.mxu0 %v131
    %197 = vmatprep.subr.mxu0 %v134
    %198 = vmatpush1.msra.mxu0 %v133
    %199 = vmatprep.subr.mxu0 %v136
    %200 = vmatpush1.msra.mxu0 %v135
    %201 = vmatprep.subr.mxu0 %v138
    %202 = vmatpush1.msra.mxu0 %v137
    %203 = vmatprep.subr.mxu0 %v140
    %204 = vmatpush1.msra.mxu0 %v139
    %205 = vmatprep.subr.mxu0 %v142
    %206 = vmatpush1.msra.mxu0 %v141
    %207 = vmatprep.subr.mxu0 %v144
    %208 = vmatpush1.msra.mxu0 %v143
    %209 = vmatprep.subr.mxu0 %v146
    %210 = vmatpush1.msra.mxu0 %v145
    %211 = vmatprep.subr.mxu0 %v148
    %212 = vmatpush1.msra.mxu0 %v147
    %213 = vmatprep.subr.mxu0 %v150
    %214 = vmatpush1.msra.mxu0 %v149
    %215 = vmatprep.mubr.f32.mxu0 %v88
    %216 = vmatmul.mubr.f32.gmra.mrb[0].mxu0 %v87
    %v217 = vpop.f32.mrb[0].mxu0
    %v218 = vadd.f32 0.0, %v217
    %v219 = vpop.f32.mrb[0].mxu0
    %v220 = vadd.f32 0.0, %v219
    %221 = vmatprep.mubr.f32.mxu0 %v90
    %222 = vmatmul.mubr.f32.gmra.mrb[0].mxu0 %v89
    %v223 = vpop.f32.mrb[0].mxu0
    %v224 = vadd.f32 0.0, %v223
    %v225 = vpop.f32.mrb[0].mxu0
    %v226 = vadd.f32 0.0, %v225
    %227 = vmatprep.mubr.f32.mxu0 %v92
    %228 = vmatmul.mubr.f32.gmra.mrb[0].mxu0 %v91
    %v229 = vpop.f32.mrb[0].mxu0
    %v230 = vadd.f32 0.0, %v229
    %v231 = vpop.f32.mrb[0].mxu0
    %v232 = vadd.f32 0.0, %v231
    %233 = vmatprep.mubr.f32.mxu0 %v94
    %234 = vmatmul.mubr.f32.gmra.mrb[0].mxu0 %v93
    %v235 = vpop.f32.mrb[0].mxu0
    %v236 = vadd.f32 0.0, %v235
    %v237 = vpop.f32.mrb[0].mxu0
    %v238 = vadd.f32 0.0, %v237
    %239 = vmatprep.mubr.f32.mxu0 %v96
    %240 = vmatmul.mubr.f32.gmra.mrb[0].mxu0 %v95
    %v241 = vpop.f32.mrb[0].mxu0
    %v242 = vadd.f32 0.0, %v241
    %v243 = vpop.f32.mrb[0].mxu0
    %v244 = vadd.f32 0.0, %v243
    %245 = vmatprep.mubr.f32.mxu0 %v98
    %246 = vmatmul.mubr.f32.gmra.mrb[0].mxu0 %v97
    %v247 = vpop.f32.mrb[0].mxu0
    %v248 = vadd.f32 0.0, %v247
    %v249 = vpop.f32.mrb[0].mxu0
    %v250 = vadd.f32 0.0, %v249
    %251 = vmatprep.mubr.f32.mxu0 %v100
    %252 = vmatmul.mubr.f32.gmra.mrb[0].mxu0 %v99
    %v253 = vpop.f32.mrb[0].mxu0
    %v254 = vadd.f32 0.0, %v253
    %v255 = vpop.f32.mrb[0].mxu0
    %v256 = vadd.f32 0.0, %v255
    %257 = vmatprep.mubr.f32.mxu0 %v102
    %258 = vmatmul.mubr.f32.gmra.mrb[0].mxu0 %v101
    %v259 = vpop.f32.mrb[0].mxu0
    %v260 = vadd.f32 0.0, %v259
    %v261 = vpop.f32.mrb[0].mxu0
    %v262 = vadd.f32 0.0, %v261
    %263 = vmatprep.mubr.f32.mxu0 %v104
    %264 = vmatmul.mubr.f32.gmra.mrb[0].mxu0 %v103
    %v265 = vpop.f32.mrb[0].mxu0
    %v266 = vadd.f32 0.0, %v265
    %v267 = vpop.f32.mrb[0].mxu0
    %v268 = vadd.f32 0.0, %v267
    %269 = vmatprep.mubr.f32.mxu0 %v106
    %270 = vmatmul.mubr.f32.gmra.mrb[0].mxu0 %v105
    %v271 = vpop.f32.mrb[0].mxu0
    %v272 = vadd.f32 0.0, %v271
    %v273 = vpop.f32.mrb[0].mxu0
    %v274 = vadd.f32 0.0, %v273
    %275 = vmatprep.mubr.f32.mxu0 %v108
    %276 = vmatmul.mubr.f32.gmra.mrb[0].mxu0 %v107
    %v277 = vpop.f32.mrb[0].mxu0
    %v278 = vadd.f32 0.0, %v277
    %v279 = vpop.f32.mrb[0].mxu0
    %v280 = vadd.f32 0.0, %v279
    %281 = vmatprep.mubr.f32.mxu0 %v110
    %282 = vmatmul.mubr.f32.gmra.mrb[0].mxu0 %v109
    %v283 = vpop.f32.mrb[0].mxu0
    %v284 = vadd.f32 0.0, %v283
    %v285 = vpop.f32.mrb[0].mxu0
    %v286 = vadd.f32 0.0, %v285
    %287 = vmatprep.mubr.f32.mxu0 %v112
    %288 = vmatmul.mubr.f32.gmra.mrb[0].mxu0 %v111
    %v289 = vpop.f32.mrb[0].mxu0
    %v290 = vadd.f32 0.0, %v289
    %v291 = vpop.f32.mrb[0].mxu0
    %v292 = vadd.f32 0.0, %v291
    %293 = vmatprep.mubr.f32.mxu0 %v114
    %294 = vmatmul.mubr.f32.gmra.mrb[0].mxu0 %v113
    %v295 = vpop.f32.mrb[0].mxu0
    %v296 = vadd.f32 0.0, %v295
    %v297 = vpop.f32.mrb[0].mxu0
    %v298 = vadd.f32 0.0, %v297
    %299 = vmatprep.mubr.f32.mxu0 %v116
    %300 = vmatmul.mubr.f32.gmra.mrb[0].mxu0 %v115
    %v301 = vpop.f32.mrb[0].mxu0
    %v302 = vadd.f32 0.0, %v301
    %v303 = vpop.f32.mrb[0].mxu0
    %v304 = vadd.f32 0.0, %v303
    %305 = vmatprep.mubr.f32.mxu0 %v118
    %306 = vmatmul.mubr.f32.gmra.mrb[0].mxu0 %v117
    %v307 = vpop.f32.mrb[0].mxu0
    %v308 = vadd.f32 0.0, %v307
    %v309 = vpop.f32.mrb[0].mxu0
    %v310 = vadd.f32 0.0, %v309
    %311 = vmatprep.mubr.f32.mxu0 %v120
    %312 = vmatmul.mubr.f32.gmra.mrb[0].mxu0 %v119
    %v313 = vpop.f32.mrb[0].mxu0
    %v314 = vadd.f32 0.0, %v313
    %v315 = vpop.f32.mrb[0].mxu0
    %v316 = vadd.f32 0.0, %v315
    %317 = vmatprep.mubr.f32.mxu0 %v122
    %318 = vmatmul.mubr.f32.gmra.mrb[0].mxu0 %v121
    %v319 = vpop.f32.mrb[0].mxu0
    %v320 = vadd.f32 0.0, %v319
    %v321 = vpop.f32.mrb[0].mxu0
    %v322 = vadd.f32 0.0, %v321
    %323 = vmatprep.mubr.f32.mxu0 %v124
    %324 = vmatmul.mubr.f32.gmra.mrb[0].mxu0 %v123
    %v325 = vpop.f32.mrb[0].mxu0
    %v326 = vadd.f32 0.0, %v325
    %v327 = vpop.f32.mrb[0].mxu0
    %v328 = vadd.f32 0.0, %v327
    %329 = vmatprep.mubr.f32.mxu0 %v126
    %330 = vmatmul.mubr.f32.gmra.mrb[0].mxu0 %v125
    %v331 = vpop.f32.mrb[0].mxu0
    %v332 = vadd.f32 0.0, %v331
    %v333 = vpop.f32.mrb[0].mxu0
    %v334 = vadd.f32 0.0, %v333
    %335 = vmatprep.mubr.f32.mxu0 %v128
    %336 = vmatmul.mubr.f32.gmra.mrb[0].mxu0 %v127
    %v337 = vpop.f32.mrb[0].mxu0
    %v338 = vadd.f32 0.0, %v337
    %v339 = vpop.f32.mrb[0].mxu0
    %v340 = vadd.f32 0.0, %v339
    %341 = vmatprep.mubr.f32.mxu0 %v130
    %342 = vmatmul.mubr.f32.gmra.mrb[0].mxu0 %v129
    %v343 = vpop.f32.mrb[0].mxu0
    %v344 = vadd.f32 0.0, %v343
    %v345 = vpop.f32.mrb[0].mxu0
    %v346 = vadd.f32 0.0, %v345
    %347 = vmatprep.mubr.f32.mxu0 %v132
    %348 = vmatmul.mubr.f32.gmra.mrb[0].mxu0 %v131
    %v349 = vpop.f32.mrb[0].mxu0
    %v350 = vadd.f32 0.0, %v349
    %v351 = vpop.f32.mrb[0].mxu0
    %v352 = vadd.f32 0.0, %v351
    %353 = vmatprep.mubr.f32.mxu0 %v134
    %354 = vmatmul.mubr.f32.gmra.mrb[0].mxu0 %v133
    %v355 = vpop.f32.mrb[0].mxu0
    %v356 = vadd.f32 0.0, %v355
    %v357 = vpop.f32.mrb[0].mxu0
    %v358 = vadd.f32 0.0, %v357
    %359 = vmatprep.mubr.f32.mxu0 %v136
    %360 = vmatmul.mubr.f32.gmra.mrb[0].mxu0 %v135
    %v361 = vpop.f32.mrb[0].mxu0
    %v362 = vadd.f32 0.0, %v361
    %v363 = vpop.f32.mrb[0].mxu0
    %v364 = vadd.f32 0.0, %v363
    %365 = vmatprep.mubr.f32.mxu0 %v138
    %366 = vmatmul.mubr.f32.gmra.mrb[0].mxu0 %v137
    %v367 = vpop.f32.mrb[0].mxu0
    %v368 = vadd.f32 0.0, %v367
    %v369 = vpop.f32.mrb[0].mxu0
    %v370 = vadd.f32 0.0, %v369
    %371 = vmatprep.mubr.f32.mxu0 %v140
    %372 = vmatmul.mubr.f32.gmra.mrb[0].mxu0 %v139
    %v373 = vpop.f32.mrb[0].mxu0
    %v374 = vadd.f32 0.0, %v373
    %v375 = vpop.f32.mrb[0].mxu0
    %v376 = vadd.f32 0.0, %v375
    %377 = vmatprep.mubr.f32.mxu0 %v142
    %378 = vmatmul.mubr.f32.gmra.mrb[0].mxu0 %v141
    %v379 = vpop.f32.mrb[0].mxu0
    %v380 = vadd.f32 0.0, %v379
    %v381 = vpop.f32.mrb[0].mxu0
    %v382 = vadd.f32 0.0, %v381
    %383 = vmatprep.mubr.f32.mxu0 %v144
    %384 = vmatmul.mubr.f32.gmra.mrb[0].mxu0 %v143
    %v385 = vpop.f32.mrb[0].mxu0
    %v386 = vadd.f32 0.0, %v385
    %v387 = vpop.f32.mrb[0].mxu0
    %v388 = vadd.f32 0.0, %v387
    %389 = vmatprep.mubr.f32.mxu0 %v146
    %390 = vmatmul.mubr.f32.gmra.mrb[0].mxu0 %v145
    %v391 = vpop.f32.mrb[0].mxu0
    %v392 = vadd.f32 0.0, %v391
    %v393 = vpop.f32.mrb[0].mxu0
    %v394 = vadd.f32 0.0, %v393
    %395 = vmatprep.mubr.f32.mxu0 %v148
    %396 = vmatmul.mubr.f32.gmra.mrb[0].mxu0 %v147
    %v397 = vpop.f32.mrb[0].mxu0
    %v398 = vadd.f32 0.0, %v397
    %v399 = vpop.f32.mrb[0].mxu0
    %v400 = vadd.f32 0.0, %v399
    %401 = vmatprep.mubr.f32.mxu0 %v150
    %402 = vmatmul.mubr.f32.gmra.mrb[0].mxu0 %v149
    %v403 = vpop.f32.mrb[0].mxu0
    %v404 = vadd.f32 0.0, %v403
    %v405 = vpop.f32.mrb[0].mxu0
    %v406 = vadd.f32 0.0, %v405
    %407 = vdwg.mxu0
    %408 = vst [vmem:[#allocation5] sm:$0xff] %v218
    %409 = vst [vmem:[#allocation5 + $0x8] sm:$0xff] %v220
    %410 = vst [vmem:[#allocation5 + $0x10] sm:$0xff] %v224
    %411 = vst [vmem:[#allocation5 + $0x18] sm:$0xff] %v226
    %412 = vst [vmem:[#allocation5 + $0x20] sm:$0xff] %v230
    %413 = vst [vmem:[#allocation5 + $0x28] sm:$0xff] %v232
    %414 = vst [vmem:[#allocation5 + $0x30] sm:$0xff] %v236
    %415 = vst [vmem:[#allocation5 + $0x38] sm:$0xff] %v238
    %416 = vst [vmem:[#allocation5 + $0x40] sm:$0xff] %v242
    %417 = vst [vmem:[#allocation5 + $0x48] sm:$0xff] %v244
    %418 = vst [vmem:[#allocation5 + $0x50] sm:$0xff] %v248
    %419 = vst [vmem:[#allocation5 + $0x58] sm:$0xff] %v250
    %420 = vst [vmem:[#allocation5 + $0x60] sm:$0xff] %v254
    %421 = vst [vmem:[#allocation5 + $0x68] sm:$0xff] %v256
    %422 = vst [vmem:[#allocation5 + $0x70] sm:$0xff] %v260
    %423 = vst [vmem:[#allocation5 + $0x78] sm:$0xff] %v262
    %424 = vst [vmem:[#allocation5 + $0x80] sm:$0xff] %v266
    %425 = vst [vmem:[#allocation5 + $0x88] sm:$0xff] %v268
    %426 = vst [vmem:[#allocation5 + $0x90] sm:$0xff] %v272
    %427 = vst [vmem:[#allocation5 + $0x98] sm:$0xff] %v274
    %428 = vst [vmem:[#allocation5 + $0xa0] sm:$0xff] %v278
    %429 = vst [vmem:[#allocation5 + $0xa8] sm:$0xff] %v280
    %430 = vst [vmem:[#allocation5 + $0xb0] sm:$0xff] %v284
    %431 = vst [vmem:[#allocation5 + $0xb8] sm:$0xff] %v286
    %432 = vst [vmem:[#allocation5 + $0xc0] sm:$0xff] %v290
    %433 = vst [vmem:[#allocation5 + $0xc8] sm:$0xff] %v292
    %434 = vst [vmem:[#allocation5 + $0xd0] sm:$0xff] %v296
    %435 = vst [vmem:[#allocation5 + $0xd8] sm:$0xff] %v298
    %436 = vst [vmem:[#allocation5 + $0xe0] sm:$0xff] %v302
    %437 = vst [vmem:[#allocation5 + $0xe8] sm:$0xff] %v304
    %438 = vst [vmem:[#allocation5 + $0xf0] sm:$0xff] %v308
    %439 = vst [vmem:[#allocation5 + $0xf8] sm:$0xff] %v310
    %440 = vst [vmem:[#allocation5 + $0x100] sm:$0xff] %v314
    %441 = vst [vmem:[#allocation5 + $0x108] sm:$0xff] %v316
    %442 = vst [vmem:[#allocation5 + $0x110] sm:$0xff] %v320
    %443 = vst [vmem:[#allocation5 + $0x118] sm:$0xff] %v322
    %444 = vst [vmem:[#allocation5 + $0x120] sm:$0xff] %v326
    %445 = vst [vmem:[#allocation5 + $0x128] sm:$0xff] %v328
    %446 = vst [vmem:[#allocation5 + $0x130] sm:$0xff] %v332
    %447 = vst [vmem:[#allocation5 + $0x138] sm:$0xff] %v334
    %448 = vst [vmem:[#allocation5 + $0x140] sm:$0xff] %v338
    %449 = vst [vmem:[#allocation5 + $0x148] sm:$0xff] %v340
    %450 = vst [vmem:[#allocation5 + $0x150] sm:$0xff] %v344
    %451 = vst [vmem:[#allocation5 + $0x158] sm:$0xff] %v346
    %452 = vst [vmem:[#allocation5 + $0x160] sm:$0xff] %v350
    %453 = vst [vmem:[#allocation5 + $0x168] sm:$0xff] %v352
    %454 = vst [vmem:[#allocation5 + $0x170] sm:$0xff] %v356
    %455 = vst [vmem:[#allocation5 + $0x178] sm:$0xff] %v358
    %456 = vst [vmem:[#allocation5 + $0x180] sm:$0xff] %v362
    %457 = vst [vmem:[#allocation5 + $0x188] sm:$0xff] %v364
    %458 = vst [vmem:[#allocation5 + $0x190] sm:$0xff] %v368
    %459 = vst [vmem:[#allocation5 + $0x198] sm:$0xff] %v370
    %460 = vst [vmem:[#allocation5 + $0x1a0] sm:$0xff] %v374
    %461 = vst [vmem:[#allocation5 + $0x1a8] sm:$0xff] %v376
    %462 = vst [vmem:[#allocation5 + $0x1b0] sm:$0xff] %v380
    %463 = vst [vmem:[#allocation5 + $0x1b8] sm:$0xff] %v382
    %464 = vst [vmem:[#allocation5 + $0x1c0] sm:$0xff] %v386
    %465 = vst [vmem:[#allocation5 + $0x1c8] sm:$0xff] %v388
    %466 = vst [vmem:[#allocation5 + $0x1d0] sm:$0xff] %v392
    %467 = vst [vmem:[#allocation5 + $0x1d8] sm:$0xff] %v394
    %468 = vst [vmem:[#allocation5 + $0x1e0] sm:$0xff] %v398
    %469 = vst [vmem:[#allocation5 + $0x1e8] sm:$0xff] %v400
    %470 = vst [vmem:[#allocation5 + $0x1f0] sm:$0xff] %v404
    %471 = vst [vmem:[#allocation5 + $0x1f8] sm:$0xff] %v406
    // Predicated region
    $region10: #{tpu_custom_call.1} parent=1 // pred_check
      _
    $region11: #{tpu_custom_call.1} parent=1 // pred_check_branch
      %473 = sbr.rel (0) target = $region13
    $region12: #{tpu_custom_call.1} parent=1 // pred_region
      %s475 = ssub.s32 8192, 8192
      %476 = vsyncadd [#allocation4], %s475
      %s477 = sshll.u32 [#allocation5], 4
      %s478 = int_to_ptr.vmem [resolvable:$true] %s477
      %483 = dma.vmem_to_hbm [thread:$0]  %s478, 8192, %s1, [#allocation4], 256, 256, 16
    $region13: #{tpu_custom_call.1} parent=1 // pred_fallthru
      _
    // Predicated region
    $region14: #{tpu_custom_call.1} parent=1 // pred_check
      _
    $region15: #{tpu_custom_call.1} parent=1 // pred_check_branch
      %485 = sbr.rel (0) target = $region17
    $region16: #{tpu_custom_call.1} parent=1 // pred_region
      %486 = dma.done [#allocation4], 8192
    $region17: #{tpu_custom_call.1} parent=1 // pred_fallthru
      _
    %487 = vsyncpa [#allocation3], 1
    %488 = vsyncpa [#allocation4], 1

</llo_original>
